<compile_context>
chip_gen: v6e
topology: v6e:2x2x1
jax: 0.10.0
libtpu: 0.0.40
codegen_flags: <defaults>
</compile_context>

<pallas_src>
import functools

import jax
import jax.numpy as jnp
from jax.experimental import pallas as pl
from jax.experimental.pallas import tpu as pltpu


def _ce_kernel(logits_ref, tgt_ref, out_ref, acc_ref, *, hw, tile_s, need_mask):
    j = pl.program_id(1)

    @pl.when(j == 0)
    def _():
        acc_ref[...] = jnp.zeros_like(acc_ref)

    logits = logits_ref[0].astype(jnp.float32)          # (C, TS) classes on sublanes
    tgt = tgt_ref[0]                                    # (1, TS) int32, lane-dense
    c, ts = logits.shape

    # stable log-sum-exp over the class (sublane) axis
    m = jnp.max(logits, axis=0, keepdims=True)          # (1, TS)
    lse = jnp.log(jnp.sum(jnp.exp(logits - m), axis=0, keepdims=True)) + m

    # gather logit at target class via one-hot select (no dynamic gather on TPU)
    cls_ids = jax.lax.broadcasted_iota(jnp.int32, (c, ts), 0)
    picked = jnp.sum(jnp.where(cls_ids == tgt, logits, 0.0), axis=0,
                     keepdims=True)                      # (1, TS)

    loss = lse - picked                                  # (1, TS)

    if need_mask:
        # drop lanes that fall past H*W in the (ragged, implicitly padded)
        # last spatial tile; mask the FINAL loss so NaN/Inf garbage is dropped.
        col_ids = j * tile_s + jax.lax.broadcasted_iota(jnp.int32, (1, ts), 1)
        loss = jnp.where(col_ids < hw, loss, 0.0)

    # per-lane accumulation (VPU only); single XLU reduce in the epilogue
    acc_ref[...] += loss

    @pl.when(j == pl.num_programs(1) - 1)
    def _():
        out_ref[...] = jnp.sum(acc_ref[...]).reshape(1, 1, 1)


def cross_entropy_pallas(output_nchw, target_nhw, *,
                         max_block_bytes=4 * 1024 * 1024):
    """F.cross_entropy(output, target) with default mean reduction.

    output_nchw: (N, C, H, W) float logits (f32 or bf16)
    target_nhw : (N, H, W) integer class labels in [0, C)
    """
    # TODO(synk): ignore_index=-100 / per-class weights of F.cross_entropy are
    # not implemented (every position is counted).
    n, c, h, w = output_nchw.shape
    hw = h * w
    rows = n * hw

    # Free, contiguous views -- no transpose, no pad, no extra HBM passes.
    logits = output_nchw.reshape(n, c, hw)
    targets = target_nhw.reshape(n, 1, hw).astype(jnp.int32)

    # Spatial tile: lane-dense (multiple of 128), sized to a VMEM budget so the
    # double-buffered logits block stays small on every TPU generation.
    itemsize = jnp.dtype(output_nchw.dtype).itemsize
    tile_budget = max(128, ((max_block_bytes // (c * itemsize)) // 128) * 128)
    tile_s = hw if hw <= tile_budget else tile_budget
    n_spatial = pl.cdiv(hw, tile_s)
    need_mask = (hw % tile_s) != 0

    # TODO(synk): for vocab-scale C where C*tile_s*itemsize*2 cannot fit VMEM
    # (notably v7x 64 MiB), add an inner class-tiled online-logsumexp loop.
    block_bytes = c * tile_s * itemsize
    vmem_limit = int(min(64 * 1024 * 1024,
                         max(16 * 1024 * 1024, 6 * block_bytes)))

    kernel = functools.partial(_ce_kernel, hw=hw, tile_s=tile_s,
                               need_mask=need_mask)

    partials = pl.pallas_call(
        kernel,
        out_shape=jax.ShapeDtypeStruct((n, 1, 1), jnp.float32),
        grid_spec=pltpu.PrefetchScalarGridSpec(
            num_scalar_prefetch=0,
            grid=(n, n_spatial),
            in_specs=[
                pl.BlockSpec((1, c, tile_s), lambda i, j: (i, 0, j)),
                pl.BlockSpec((1, 1, tile_s), lambda i, j: (i, 0, j)),
            ],
            out_specs=pl.BlockSpec((1, 1, 1), lambda i, j: (i, 0, 0)),
            scratch_shapes=[pltpu.VMEM((1, tile_s), jnp.float32)],
        ),
        compiler_params=pltpu.CompilerParams(
            dimension_semantics=("parallel", "arbitrary"),
            vmem_limit_bytes=vmem_limit,
        ),
    )(logits, targets)

    # Combine per-image partial sums and take the mean outside the kernel.
    return jnp.sum(partials) / jnp.float32(rows)


def _cross_entropy_ref(output_nchw, target_nhw):
    n, c, h, w = output_nchw.shape
    logits = jnp.transpose(output_nchw, (0, 2, 3, 1)).reshape(-1, c)
    tgt = target_nhw.reshape(-1)
    lse = jax.nn.logsumexp(logits.astype(jnp.float32), axis=-1)
    picked = jnp.take_along_axis(logits.astype(jnp.float32),
                                 tgt[:, None], axis=-1)[:, 0]
    return jnp.mean(lse - picked)


if __name__ == "__main__":
    key = jax.random.PRNGKey(0)
    k_logits, k_tgt = jax.random.split(key)

    N, C, H, W = 2, 4, 16, 16
    output = jax.random.normal(k_logits, (N, C, H, W), dtype=jnp.float32)
    target = jax.random.randint(k_tgt, (N, H, W), 0, C, dtype=jnp.int32)

    loss = cross_entropy_pallas(output, target)
    jax.block_until_ready(loss)

    ref = _cross_entropy_ref(output, target)
    assert jnp.allclose(loss, ref, atol=1e-5, rtol=1e-5), (loss, ref)

    print("KERNEL_OK")
</pallas_src>

<mosaic_0001>
module attributes {stable_mosaic.version = 11 : i64} {
  func.func @_ce_kernel(%arg0: i32, %arg1: i32, %arg2: memref<1x4x256xf32, #tpu.memory_space<vmem>>, %arg3: memref<1x1x256xi32, #tpu.memory_space<vmem>>, %arg4: memref<1x1x1xf32, #tpu.memory_space<vmem>>, %arg5: memref<1x256xf32, #tpu.memory_space<vmem>>) attributes {dimension_semantics = [#tpu.dimension_semantics<parallel>, #tpu.dimension_semantics<arbitrary>], iteration_bounds = array<i64: 2, 1>, scalar_prefetch = 0 : i64, scratch_operands = 1 : i64, tpu.core_type = #tpu.core_type<tc>, window_params = [{transform_indices = @transform_0, window_bounds = array<i64: 1, 4, 256>}, {transform_indices = @transform_1, window_bounds = array<i64: 1, 1, 256>}, {transform_indices = @transform_2, window_bounds = array<i64: 1, 1, 1>}]} {
    %c0_i32 = arith.constant 0 : i32
    %0 = arith.cmpi eq, %arg1, %c0_i32 : i32
    %1 = arith.extui %0 : i1 to i32
    %c0_i32_0 = arith.constant 0 : i32
    %2 = arith.cmpi ne, %1, %c0_i32_0 : i32
    scf.if %2 {
      %cst_15 = arith.constant 0.000000e+00 : f32
      %30 = vector.broadcast %cst_15 : f32 to vector<1x256xf32>
      %c0_16 = arith.constant 0 : index
      %c0_17 = arith.constant 0 : index
      %31 = vector.load %arg5[%c0_16, %c0_17] : memref<1x256xf32, #tpu.memory_space<vmem>>, vector<1x256xf32>
      tpu.vector_store %arg5[%c0_16, %c0_17], %30 {strides = array<i32>} : memref<1x256xf32, #tpu.memory_space<vmem>>, vector<1x256xf32>,
    } else {
    }
    %c0 = arith.constant 0 : index
    %c0_1 = arith.constant 0 : index
    %c0_2 = arith.constant 0 : index
    %3 = vector.load %arg2[%c0, %c0_1, %c0_2] : memref<1x4x256xf32, #tpu.memory_space<vmem>>, vector<1x4x256xf32>
    %4 = vector.shape_cast %3 : vector<1x4x256xf32> to vector<4x256xf32>
    %c0_3 = arith.constant 0 : index
    %c0_4 = arith.constant 0 : index
    %c0_5 = arith.constant 0 : index
    %5 = vector.load %arg3[%c0_3, %c0_4, %c0_5] : memref<1x1x256xi32, #tpu.memory_space<vmem>>, vector<1x1x256xi32>
    %6 = vector.shape_cast %5 : vector<1x1x256xi32> to vector<1x256xi32>
    %cst = arith.constant dense<0xFF800000> : vector<256xf32>
    %7 = vector.multi_reduction <maximumf>, %4, %cst [0] : vector<4x256xf32> to vector<256xf32>
    %8 = vector.shape_cast %7 : vector<256xf32> to vector<1x256xf32>
    %9 = vector.broadcast %8 : vector<1x256xf32> to vector<4x256xf32>
    %10 = arith.subf %4, %9 : vector<4x256xf32>
    %11 = math.exp %10 : vector<4x256xf32>
    %cst_6 = arith.constant dense<0.000000e+00> : vector<256xf32>
    %12 = vector.multi_reduction <add>, %11, %cst_6 [0] : vector<4x256xf32> to vector<256xf32>
    %13 = vector.shape_cast %12 : vector<256xf32> to vector<1x256xf32>
    %14 = math.log %13 : vector<1x256xf32>
    %15 = arith.addf %14, %8 : vector<1x256xf32>
    %16 = tpu.iota {dimensions = array<i32: 0>} : vector<4x256xi32>
    %17 = vector.broadcast %6 : vector<1x256xi32> to vector<4x256xi32>
    %18 = arith.cmpi eq, %16, %17 : vector<4x256xi32>
    %cst_7 = arith.constant 0.000000e+00 : f32
    %19 = vector.broadcast %cst_7 : f32 to vector<4x256xf32>
    %20 = arith.select %18, %4, %19 : vector<4x256xi1>, vector<4x256xf32>
    %cst_8 = arith.constant dense<0.000000e+00> : vector<256xf32>
    %21 = vector.multi_reduction <add>, %20, %cst_8 [0] : vector<4x256xf32> to vector<256xf32>
    %22 = vector.shape_cast %21 : vector<256xf32> to vector<1x256xf32>
    %23 = arith.subf %15, %22 : vector<1x256xf32>
    %c0_9 = arith.constant 0 : index
    %c0_10 = arith.constant 0 : index
    %24 = vector.load %arg5[%c0_9, %c0_10] : memref<1x256xf32, #tpu.memory_space<vmem>>, vector<1x256xf32>
    %25 = arith.addf %24, %23 : vector<1x256xf32>
    %c0_11 = arith.constant 0 : index
    %c0_12 = arith.constant 0 : index
    %26 = vector.load %arg5[%c0_11, %c0_12] : memref<1x256xf32, #tpu.memory_space<vmem>>, vector<1x256xf32>
    tpu.vector_store %arg5[%c0_11, %c0_12], %25 {strides = array<i32>} : memref<1x256xf32, #tpu.memory_space<vmem>>, vector<1x256xf32>,
    %c0_i32_13 = arith.constant 0 : i32
    %27 = arith.cmpi eq, %arg1, %c0_i32_13 : i32
    %28 = arith.extui %27 : i1 to i32
    %c0_i32_14 = arith.constant 0 : i32
    %29 = arith.cmpi ne, %28, %c0_i32_14 : i32
    scf.if %29 {
      %c0_15 = arith.constant 0 : index
      %c0_16 = arith.constant 0 : index
      %30 = vector.load %arg5[%c0_15, %c0_16] : memref<1x256xf32, #tpu.memory_space<vmem>>, vector<1x256xf32>
      %31 = vector.shape_cast %30 : vector<1x256xf32> to vector<1x1x256xf32>
      %cst_17 = arith.constant dense<0.000000e+00> : vector<1xf32>
      %32 = vector.multi_reduction <add>, %31, %cst_17 [1, 2] : vector<1x1x256xf32> to vector<1xf32>
      %33 = vector.shape_cast %32 : vector<1xf32> to vector<1x1x1xf32>
      %34 = vector.extract %33[0, 0, 0] : f32 from vector<1x1x1xf32>
      %35 = vector.broadcast %34 : f32 to vector<1x1x1xf32>
      %c0_18 = arith.constant 0 : index
      %c0_19 = arith.constant 0 : index
      %c0_20 = arith.constant 0 : index
      %36 = vector.load %arg4[%c0_18, %c0_19, %c0_20] : memref<1x1x1xf32, #tpu.memory_space<vmem>>, vector<1x1x1xf32>
      tpu.vector_store %arg4[%c0_18, %c0_19, %c0_20], %35 {strides = array<i32>} : memref<1x1x1xf32, #tpu.memory_space<vmem>>, vector<1x1x1xf32>,
    } else {
    }
    return
  }
  func.func @transform_0(%arg0: i32, %arg1: i32) -> (i32, i32, i32) {
    %c0_i32 = arith.constant 0 : i32
    %c0_i32_0 = arith.constant 0 : i32
    return %arg0, %c0_i32, %arg1 : i32, i32, i32
  }
  func.func @transform_1(%arg0: i32, %arg1: i32) -> (i32, i32, i32) {
    %c0_i32 = arith.constant 0 : i32
    %c0_i32_0 = arith.constant 0 : i32
    return %arg0, %c0_i32, %arg1 : i32, i32, i32
  }
  func.func @transform_2(%arg0: i32, %arg1: i32) -> (i32, i32, i32) {
    %c0_i32 = arith.constant 0 : i32
    %c0_i32_0 = arith.constant 0 : i32
    %c0_i32_1 = arith.constant 0 : i32
    return %arg0, %c0_i32, %c0_i32_0 : i32, i32, i32
  }
}

</mosaic_0001>

<llo_original>
// kernel: tpu_custom_call.1
$region0: #{tpu_custom_call.1}
  #allocation0 [shape = 'u32[]', space=smem, size = 0x4, offset = 0x4, fixed_abs, tag = 'smem constant byte address 0x4 - core index']
  #allocation1 [shape = 'u32[144,128]{1,0:T(1,128)}', space=vmem, size = 0x12000, scoped, tag = 'internal scratch']
  #allocation2 [shape = 'f32[1,256]{1,0:T(1,128)}', space=vmem, size = 0x400, scoped, tag = 'scratch operand']
  %s0 = inlined_call_operand.hbm [shape: f32[2,4,256], index: 0, kind: input, shape index: {}]
  %s1 = inlined_call_operand.hbm [shape: s32[2,1,256], index: 1, kind: input, shape index: {}]
  %s2 = inlined_call_operand.vmem [shape: f32[2,1,1], index: 2, kind: output, shape index: {}]
  %s3 = sld [smem:[#allocation0]]
  $region57: #{tpu_custom_call.1} parent=0
    _
  %s5 = ssub.s32 1, %s3
  %s6 = scalar_select 0, %s5, %s3
  $region1: #{tpu_custom_call.1} parent=0
    #allocation3 [shape = 'u8[8192]{0}', space=vmem, size = 0x2000, scoped, tag = 'input window, operand 0']
    #allocation4 [shape = 's32[2]{0}', space=sflag, size = 0x8, scoped, tag = 'scoped memory for tpu_custom_call.1']
    #allocation5 [shape = 'u8[2048]{0}', space=vmem, size = 0x800, scoped, tag = 'input window, operand 1']
    #allocation6 [shape = 's32[2]{0}', space=sflag, size = 0x8, scoped, tag = 'scoped memory for tpu_custom_call.1']
    %7 = vsyncpa [#allocation4], 0
    %s8 = scalar_lea.sflag [#allocation4], 1
    %9 = vsyncpa %s8, 0
    %10 = vsyncpa [#allocation6], 0
    %s11 = scalar_lea.sflag [#allocation6], 1
    %12 = vsyncpa %s11, 0
    loop: start=0, step=1, limit=4
    $region2: #{tpu_custom_call.1} parent=1 // loop_pre_header
      _
    $region3: #{tpu_custom_call.1} parent=1 // loop_header
      %s14 = sphi 0, %s18
      %p15 = scmp.ge.s32.totalorder %s14, 4
      %s21 = sphi 0, %s33
      %s22 = sphi 0, %s29
      %s23 = sphi 0, %s21
      %s24 = sphi 0, %s22
      %s25 = sphi 0, %s23
      %s26 = sphi 0, %s24
      %s38 = sphi 0, %s40
      %s41 = sphi 0, %s38
      %s42 = sphi 0, %s41
      %s58 = sphi 0, %s42
      %s66 = sphi 0, %s68
      %s69 = sphi 0, %s66
      %s70 = sphi 0, %s69
      %s86 = sphi 0, %s70
      %s92 = sphi 0, %s94
      %s95 = sphi 0, %s92
      %s96 = sphi 0, %s95
      %s112 = sphi 0, %s96
    $region4: #{tpu_custom_call.1} parent=1 // loop_header_branch
      %17 = sbr.rel (%p15) target = $region8
    $region5: #{tpu_custom_call.1} parent=1 // loop_body
      %s19 = ssub.s32 %s14, 1
      %s20 = ssub.s32 %s14, 2
      %s27 = sadd.s32 1, %s22
      %p28 = scmp.ge.s32.totalorder %s27, 1
      %s29 = scalar_select %p28, 0, %s27
      %s30 = sadd.s32 1, %s21
      %s31 = scalar_select %p28, %s30, %s21
      %p32 = scmp.ge.s32.totalorder %s31, 2
      %s33 = scalar_select %p32, 0, %s31
      %s34 = ssub.s32 %s21, %s33
      %s35 = ssub.s32 %s22, %s29
      %s36 = sor.u32 %s34, %s35
      %p37 = scmp.eq.s32.totalorder %s36, 0
      %s39 = sadd.s32 %s38, 1
      %s40 = scalar_select %p37, %s38, %s39
      %p43 = pneg %p37
      %p44 = scmp.eq.s32.totalorder %s14, 1
      %p45 = por %p43, %p44
      %p46 = scmp.ne.s32.totalorder %s38, %s41
      %p47 = scmp.eq.s32.totalorder %s14, 0
      %p48 = por %p46, %p47
      %p49 = scmp.ne.s32.totalorder %s38, %s41
      %p50 = scmp.eq.s32.totalorder %s19, 1
      %p51 = por %p49, %p50
      %p52 = scmp.ne.s32.totalorder %s41, %s42
      %p53 = scmp.eq.s32.totalorder %s19, 0
      %p54 = por %p52, %p53
      %p55 = scmp.ne.s32.totalorder %s41, %s42
      %p56 = scmp.eq.s32.totalorder %s20, 1
      %p57 = por %p55, %p56
      %p59 = scmp.ne.s32.totalorder %s42, %s58
      %p60 = scmp.eq.s32.totalorder %s20, 0
      %p61 = por %p59, %p60
      %s62 = ssub.s32 %s21, %s33
      %s63 = ssub.s32 %s22, %s29
      %s64 = sor.u32 %s62, %s63
      %p65 = scmp.eq.s32.totalorder %s64, 0
      %s67 = sadd.s32 %s66, 1
      %s68 = scalar_select %p65, %s66, %s67
      %p71 = pneg %p65
      %p72 = scmp.eq.s32.totalorder %s14, 1
      %p73 = por %p71, %p72
      %p74 = scmp.ne.s32.totalorder %s66, %s69
      %p75 = scmp.eq.s32.totalorder %s14, 0
      %p76 = por %p74, %p75
      %p77 = scmp.ne.s32.totalorder %s66, %s69
      %p78 = scmp.eq.s32.totalorder %s19, 1
      %p79 = por %p77, %p78
      %p80 = scmp.ne.s32.totalorder %s69, %s70
      %p81 = scmp.eq.s32.totalorder %s19, 0
      %p82 = por %p80, %p81
      %p83 = scmp.ne.s32.totalorder %s69, %s70
      %p84 = scmp.eq.s32.totalorder %s20, 1
      %p85 = por %p83, %p84
      %p87 = scmp.ne.s32.totalorder %s70, %s86
      %p88 = scmp.eq.s32.totalorder %s20, 0
      %p89 = por %p87, %p88
      %s90 = ssub.s32 %s21, %s33
      %p91 = scmp.eq.s32.totalorder %s90, 0
      %s93 = sadd.s32 %s92, 1
      %s94 = scalar_select %p91, %s92, %s93
      %p97 = pneg %p91
      %p98 = scmp.eq.s32.totalorder %s14, 1
      %p99 = por %p97, %p98
      %p100 = scmp.ne.s32.totalorder %s92, %s95
      %p101 = scmp.eq.s32.totalorder %s14, 0
      %p102 = por %p100, %p101
      %p103 = scmp.ne.s32.totalorder %s92, %s95
      %p104 = scmp.eq.s32.totalorder %s19, 1
      %p105 = por %p103, %p104
      %p106 = scmp.ne.s32.totalorder %s95, %s96
      %p107 = scmp.eq.s32.totalorder %s19, 0
      %p108 = por %p106, %p107
      %p109 = scmp.ne.s32.totalorder %s95, %s96
      %p110 = scmp.eq.s32.totalorder %s20, 1
      %p111 = por %p109, %p110
      %p113 = scmp.ne.s32.totalorder %s96, %s112
      %p114 = scmp.eq.s32.totalorder %s20, 0
      %p115 = por %p113, %p114
      %p116 = scmp.le.s32.totalorder 1, %s14
      %p117 = scmp.lt.s32.totalorder %s14, 3
      %p118 = pnand %p116, %p117
      %p119 = pneg %p118
      // Predicated region
      $region9: #{tpu_custom_call.1} parent=5 // pred_check
        _
      $region10: #{tpu_custom_call.1} parent=5 // pred_check_branch
        %121 = sbr.rel (%p118) target = $region12
      $region11: #{tpu_custom_call.1} parent=5 // pred_region
        %s122 = ssub.s32 %s14, 1
      $region12: #{tpu_custom_call.1} parent=5 // pred_fallthru
        _
      %p123 = scmp.lt.s32.totalorder %s14, 2
      // Predicated region
      $region13: #{tpu_custom_call.1} parent=5 // pred_check
        %p124 = pneg %p123
      $region14: #{tpu_custom_call.1} parent=5 // pred_check_branch
        %126 = sbr.rel (%p124) target = $region16
      $region15: #{tpu_custom_call.1} parent=5 // pred_region
        // Predicated region
        $region17: #{tpu_custom_call.1} parent=15 // pred_check
          %p127 = pneg %p48
        $region18: #{tpu_custom_call.1} parent=15 // pred_check_branch
          %129 = sbr.rel (%p127) target = $region20
        $region19: #{tpu_custom_call.1} parent=15 // pred_region
          %s130 = sand.u32 %s38, 1
          %s131 = scalar_lea.sflag [#allocation4], %s130
          %s132 = sand.u32 %s38, 1
          %s133 = smul.addr %s132, 8
          %s134 = scalar_lea.vmem [#allocation3], %s133
          %s135 = smul.u32 2, %s22
          %s137 = ssub.s32 128, 128
          %138 = vsyncadd %s131, %s137
          %s139 = smul.addr %s21, 2
          %s140 = sadd.s32 %s135, %s139
          %s141 = smul.addr %s140, 64
          %s142 = scalar_lea.hbm %s0, %s141
          %s144 = sshll.u32 %s134, 4
          %s145 = int_to_ptr.vmem [resolvable:$true] %s144
          %147 = dma.hbm_to_vmem [thread:$0]  %s142, 128, %s145, %s131
        $region20: #{tpu_custom_call.1} parent=15 // pred_fallthru
          _
        // Predicated region
        $region21: #{tpu_custom_call.1} parent=15 // pred_check
          %p148 = pneg %p76
        $region22: #{tpu_custom_call.1} parent=15 // pred_check_branch
          %150 = sbr.rel (%p148) target = $region24
        $region23: #{tpu_custom_call.1} parent=15 // pred_region
          %s151 = sand.u32 %s66, 1
          %s152 = scalar_lea.sflag [#allocation6], %s151
          %s153 = sand.u32 %s66, 1
          %s154 = smul.addr %s153, 2
          %s155 = scalar_lea.vmem [#allocation5], %s154
          %s156 = smul.u32 2, %s22
          %s158 = ssub.s32 32, 32
          %159 = vsyncadd %s152, %s158
          %s160 = smul.addr %s21, 2
          %s161 = sadd.s32 %s156, %s160
          %s162 = smul.addr %s161, 16
          %s163 = scalar_lea.hbm %s1, %s162
          %s165 = sshll.u32 %s155, 4
          %s166 = int_to_ptr.vmem [resolvable:$true] %s165
          %168 = dma.hbm_to_vmem [thread:$0]  %s163, 32, %s166, %s152
        $region24: #{tpu_custom_call.1} parent=15 // pred_fallthru
          _
      $region16: #{tpu_custom_call.1} parent=5 // pred_fallthru
        _
      %p169 = scmp.le.s32.totalorder 1, %s14
      %p170 = scmp.lt.s32.totalorder %s14, 3
      %p171 = pnand %p169, %p170
      %p172 = pneg %p171
      // Predicated region
      $region25: #{tpu_custom_call.1} parent=5 // pred_check
        _
      $region26: #{tpu_custom_call.1} parent=5 // pred_check_branch
        %174 = sbr.rel (%p171) target = $region28
      $region27: #{tpu_custom_call.1} parent=5 // pred_region
        %s175 = ssub.s32 %s14, 1
        %s176 = sand.u32 %s41, 1
        %s177 = scalar_lea.sflag [#allocation4], %s176
        %s178 = sand.u32 %s41, 1
        %s179 = smul.addr %s178, 8
        %s180 = scalar_lea.vmem [#allocation3], %s179
        // Predicated region
        $region29: #{tpu_custom_call.1} parent=27 // pred_check
          %p181 = pneg %p54
        $region30: #{tpu_custom_call.1} parent=27 // pred_check_branch
          %183 = sbr.rel (%p181) target = $region32
        $region31: #{tpu_custom_call.1} parent=27 // pred_region
          %184 = dma.done %s177, 128
        $region32: #{tpu_custom_call.1} parent=27 // pred_fallthru
          _
        %s185 = sand.u32 %s69, 1
        %s186 = scalar_lea.sflag [#allocation6], %s185
        %s187 = sand.u32 %s69, 1
        %s188 = smul.addr %s187, 2
        %s189 = scalar_lea.vmem [#allocation5], %s188
        // Predicated region
        $region33: #{tpu_custom_call.1} parent=27 // pred_check
          %p190 = pneg %p82
        $region34: #{tpu_custom_call.1} parent=27 // pred_check_branch
          %192 = sbr.rel (%p190) target = $region36
        $region35: #{tpu_custom_call.1} parent=27 // pred_region
          %193 = dma.done %s186, 32
        $region36: #{tpu_custom_call.1} parent=27 // pred_fallthru
          _
        %s194 = sand.u32 %s41, 1
        %s195 = scalar_lea.sflag [#allocation4], %s194
        %s196 = sand.u32 %s41, 1
        %s197 = smul.addr %s196, 8
        %s198 = scalar_lea.vmem [#allocation3], %s197
        %p199 = pneg %p54
        %p200 = pneg %p51
        %s201 = sand.u32 %s69, 1
        %s202 = scalar_lea.sflag [#allocation6], %s201
        %s203 = sand.u32 %s69, 1
        %s204 = smul.addr %s203, 2
        %s205 = scalar_lea.vmem [#allocation5], %s204
        %p206 = pneg %p82
        %p207 = pneg %p79
        %p208 = pneg %p108
        %p209 = pneg %p105
        %p210 = scmp.lt.s32.totalorder %s23, 1
        %s211 = scalar_select %p210, %s23, 1
        %s212 = scalar_lea.vmem %s2, %s211
        %s213 = smul.u32 2, %s24
        %s214 = smul.u32 2, %s24
        %p215 = scmp.lt.s32.totalorder %s23, 1
        %s216 = scalar_select %p215, %s23, 1
        %s217 = scalar_lea.vmem %s2, %s216
        %p218 = scmp.eq.s32.totalorder %s24, 0
        // Predicated region
        $region37: #{tpu_custom_call.1} parent=27 // pred_check
          %p219 = pneg %p218
        $region38: #{tpu_custom_call.1} parent=27 // pred_check_branch
          %221 = sbr.rel (%p219) target = $region40
        $region39: #{tpu_custom_call.1} parent=27 // pred_region
          %v222 = vlaneseq
          %vm223 = vcmp.ge.s32.totalorder %v222, 0
          %vm224 = vcmp.lt.s32.totalorder %v222, 256
          %vm225 = vmand %vm223, %vm224
          %226 = vst.msk [vmem:[#allocation2] sm:$0x3] %vm225, 0.0
        $region40: #{tpu_custom_call.1} parent=27 // pred_fallthru
          _
        %v227 = vld [vmem:[%s180] sm:$0xff]
        %v228 = vld [vmem:[%s189] sm:$0x3]
        %v230 = vcombine.high %v227, %v227
        %vm232 = vcmask 1043456
        %v233 = vsel %vm232, %v227, -inf
        %v234 = vrot.slane %v233, 4
        %v235 = vmax.f32 %v233, %v234
        %v236 = vrot.slane %v235, 2
        %v237 = vmax.f32 %v235, %v236
        %v238 = vrot.slane %v237, 1
        %v239 = vmax.f32 %v237, %v238
        %v240 = vsel %vm232, %v230, -inf
        %v241 = vrot.slane %v240, 4
        %v242 = vmax.f32 %v240, %v241
        %v243 = vrot.slane %v242, 2
        %v244 = vmax.f32 %v242, %v243
        %v245 = vrot.slane %v244, 1
        %v246 = vmax.f32 %v244, %v245
        %v249 = vcombine.low %v239, %v246
        %v251 = vsub.f32 %v227, %v249
        %v252 = vmul.f32 %v251, 1.442695
        %v253 = vpow.pop %v252
        %v255 = vcombine.high %v253, %v253
        %v257 = vsel %vm232, %v253, 0.0
        %v258 = vrot.slane %v257, 4
        %v259 = vadd.f32 %v257, %v258
        %v260 = vrot.slane %v259, 2
        %v261 = vadd.f32 %v259, %v260
        %v262 = vrot.slane %v261, 1
        %v263 = vadd.f32 %v261, %v262
        %v264 = vsel %vm232, %v255, 0.0
        %v265 = vrot.slane %v264, 4
        %v266 = vadd.f32 %v264, %v265
        %v267 = vrot.slane %v266, 2
        %v268 = vadd.f32 %v266, %v267
        %v269 = vrot.slane %v268, 1
        %v270 = vadd.f32 %v268, %v269
        %v271 = vlog2.pop %v263
        %v272 = vmul.f32 %v271, 0.6931472
        %v273 = vlog2.pop %v270
        %v274 = vmul.f32 %v273, 0.6931472
        %v275 = vadd.f32 %v272, %v239
        %v276 = vadd.f32 %v274, %v246
        %v277 = vlaneseq
        %v278 = vshrl.u32 %v277, 7
        %v279 = vlaneseq
        %v280 = vshrl.u32 %v279, 7
        %v281 = vsub.s32 0, %v280
        %v282 = vrot.slane %v228, %v281
        %v283 = vlaneseq
        %v284 = vshrl.u32 %v283, 7
        %v285 = vsub.s32 1, %v284
        %v286 = vrot.slane %v228, %v285
        %vm287 = vcmp.eq.s32.totalorder %v278, %v282
        %vm288 = vcmp.eq.s32.totalorder %v278, %v286
        %v289 = vsel %vm287, %v227, 0.0
        %v290 = vsel %vm288, %v230, 0.0
        %v291 = vsel %vm232, %v289, 0.0
        %v292 = vrot.slane %v291, 4
        %v293 = vadd.f32 %v291, %v292
        %v294 = vrot.slane %v293, 2
        %v295 = vadd.f32 %v293, %v294
        %v296 = vrot.slane %v295, 1
        %v297 = vadd.f32 %v295, %v296
        %v298 = vsel %vm232, %v290, 0.0
        %v299 = vrot.slane %v298, 4
        %v300 = vadd.f32 %v298, %v299
        %v301 = vrot.slane %v300, 2
        %v302 = vadd.f32 %v300, %v301
        %v303 = vrot.slane %v302, 1
        %v304 = vadd.f32 %v302, %v303
        %v305 = vsub.f32 %v275, %v297
        %v306 = vsub.f32 %v276, %v304
        %v307 = vld [vmem:[#allocation2] sm:$0x3]
        %v310 = vcombine.low %v305, %v306
        %v312 = vunpack.c.l.s4 1966171168
        %v313 = vunpack.c.0.s8 %v312
        %v314 = vlaneseq
        %v315 = vshrl.u32 %v314, 7
        %v316 = vsub.s32 %v313, %v315
        %v317 = vrot.slane %v310, %v316
        %v319 = vunpack.c.l.s4 1966171168
        %v320 = vunpack.c.0.s8 %v319
        %v321 = vlaneseq
        %v322 = vshrl.u32 %v321, 7
        %v323 = vsub.s32 %v320, %v322
        %v324 = vrot.slane %v317, %v323
        %v326 = vadd.f32 %v307, %v324
        %v327 = vlaneseq
        %vm328 = vcmp.ge.s32.totalorder %v327, 0
        %vm329 = vcmp.lt.s32.totalorder %v327, 256
        %vm330 = vmand %vm328, %vm329
        %331 = vst.msk [vmem:[#allocation2] sm:$0x3] %vm330, %v326
        // Predicated region
        $region41: #{tpu_custom_call.1} parent=27 // pred_check
          %p332 = pneg %p218
        $region42: #{tpu_custom_call.1} parent=27 // pred_check_branch
          %334 = sbr.rel (%p332) target = $region44
        $region43: #{tpu_custom_call.1} parent=27 // pred_region
          %v335 = vld [vmem:[#allocation2] sm:$0x3]
          %v337 = vlaneseq
          %v338 = vshrl.u32 %v337, 7
          %v339 = vsub.s32 0, %v338
          %v340 = vrot.slane %v335, %v339
          %v341 = vlaneseq
          %v342 = vshrl.u32 %v341, 7
          %v343 = vsub.s32 1, %v342
          %v344 = vrot.slane %v335, %v343
          %vm347 = vcmask 1040384
          %v348 = vsel %vm347, %v340, 0.0
          %v349 = vsel %vm347, %v344, 0.0
          %v350 = vadd.f32 %v348, %v349
          %351 = vadd.xlane.f32.xlu0 %v350
          %v352 = vpop.xlane.xlu0 %351
          %v353 = vrot.slane %v352, 4
          %v354 = vadd.f32 %v352, %v353
          %v355 = vrot.slane %v354, 2
          %v356 = vadd.f32 %v354, %v355
          %v357 = vrot.slane %v356, 1
          %v358 = vadd.f32 %v356, %v357
          %s359 = vtos %v358
          %v360 = vstv %s359
          %vm361 = vcmask 0
          %362 = vst.msk [vmem:[%s217] sm:$0x1] %vm361, %v360
        $region44: #{tpu_custom_call.1} parent=27 // pred_fallthru
          _
        %p363 = scmp.lt.s32.totalorder %s23, 1
        %s364 = scalar_select %p363, %s23, 1
        %s365 = scalar_lea.vmem %s2, %s364
        // Predicated region
        $region45: #{tpu_custom_call.1} parent=27 // pred_check
          %p366 = pneg %p105
        $region46: #{tpu_custom_call.1} parent=27 // pred_check_branch
          %368 = sbr.rel (%p366) target = $region48
        $region47: #{tpu_custom_call.1} parent=27 // pred_region
          _
        $region48: #{tpu_custom_call.1} parent=27 // pred_fallthru
          _
      $region28: #{tpu_custom_call.1} parent=5 // pred_fallthru
        _
      %p369 = scmp.le.s32.totalorder 2, %s14
      // Predicated region
      $region49: #{tpu_custom_call.1} parent=5 // pred_check
        %p370 = pneg %p369
      $region50: #{tpu_custom_call.1} parent=5 // pred_check_branch
        %372 = sbr.rel (%p370) target = $region52
      $region51: #{tpu_custom_call.1} parent=5 // pred_region
        %s373 = ssub.s32 %s14, 2
        // Predicated region
        $region53: #{tpu_custom_call.1} parent=51 // pred_check
          %p374 = pneg %p111
        $region54: #{tpu_custom_call.1} parent=51 // pred_check_branch
          %376 = sbr.rel (%p374) target = $region56
        $region55: #{tpu_custom_call.1} parent=51 // pred_region
          %p377 = scmp.lt.s32.totalorder %s25, 1
          %s378 = scalar_select %p377, %s25, 1
          %s379 = scalar_lea.vmem %s2, %s378
        $region56: #{tpu_custom_call.1} parent=51 // pred_fallthru
          _
      $region52: #{tpu_custom_call.1} parent=5 // pred_fallthru
        _
    $region6: #{tpu_custom_call.1} parent=1 // loop_footer
      %s18 = sadd.s32 1, %s14
    $region7: #{tpu_custom_call.1} parent=1 // loop_footer_branch
      %13 = sbr.rel target = $region3
    $region8: #{tpu_custom_call.1} parent=1 // loop_exit
      _
    %380 = vsyncpa [#allocation4], 1
    %s381 = scalar_lea.sflag [#allocation4], 1
    %382 = vsyncpa %s381, 1
    %383 = vsyncpa [#allocation6], 1
    %s384 = scalar_lea.sflag [#allocation6], 1
    %385 = vsyncpa %s384, 1

</llo_original>
